<compile_context>
chip_gen: v5e
topology: v5e:2x2
jax: 0.10.0
libtpu: 0.0.40
codegen_flags: <defaults>
</compile_context>

<pallas_src>
import functools

import jax
import jax.numpy as jnp
from jax.experimental import pallas as pl
from jax.experimental.pallas import tpu as pltpu


def _round_up(x, m):
    return ((x + m - 1) // m) * m


def _cdiv(a, b):
    return -(-a // b)


# --------------------------------------------------------------------------- #
# Single-pass kernel: whole hw extent of each row block resident in VMEM.
# --------------------------------------------------------------------------- #
def _make_rows_kernel(hw):
    inv_hw = 1.0 / hw
    # hw == 1 gives NaN std in torch (ddof=1); we mirror that semantics.
    inv_hw_m1 = 1.0 / (hw - 1) if hw > 1 else float("nan")

    def kernel(f_ref, fs_ref, o_ref):
        # (rb, hw) tiles.  The tail row block may contain unspecified rows
        # beyond `rows`; they compute garbage that is never stored (masked vst).
        f = f_ref[...].astype(jnp.float32)
        fs = fs_ref[...].astype(jnp.float32)

        mean_f = jnp.sum(f, axis=1, keepdims=True) * inv_hw
        mean_fs = jnp.sum(fs, axis=1, keepdims=True) * inv_hw

        # Two-pass form for f (matches torch's numerics; the delta is fused
        # into the reduction, never held as a live full tile).
        df = f - mean_f
        ss_f = jnp.sum(df * df, axis=1, keepdims=True)
        # One-pass form for fs avoids materializing a second full-tile delta.
        ss_fs = jnp.sum(fs * fs, axis=1, keepdims=True) - hw * mean_fs * mean_fs
        ss_fs = jnp.maximum(ss_fs, 0.0)

        # Unbiased std (Bessel's correction) to match torch.Tensor.std default.
        std_f = jnp.sqrt(ss_f * inv_hw_m1)
        std_fs = jnp.sqrt(ss_fs * inv_hw_m1)

        # Per-row scalars only: exact divide is fine.
        scale = std_fs / (std_f + 1e-07)
        shift = mean_fs - mean_f * scale
        o_ref[...] = (f * scale + shift).astype(o_ref.dtype)

    return kernel


def _adain_single_pass(f2, fs2, rows, hw, itemsize, align, tile_cap, vmem_limit):
    # Cap each (rb, hw) tile at ~tile_cap bytes — bandwidth saturates well
    # below that, and small tiles keep plenty of VMEM slack (v7x: 64 MiB).
    rb = max(align, (tile_cap // max(1, hw * itemsize)) // align * align)
    # Aim for >= 8 grid steps (pipeline overlap + v7x 2-TC balance) when the
    # row count allows it.
    if rows >= 8 * align:
        rb = min(rb, _round_up(_cdiv(rows, 8), align))
    rb = min(rb, _round_up(rows, align))
    steps = _cdiv(rows, rb)
    # v7x: prefer an even step count so its two TensorCores stay balanced.
    if steps > 1 and steps % 2 == 1:
        rb_even = max(align, _round_up(_cdiv(rows, steps + 1), align))
        if _cdiv(rows, rb_even) % 2 == 0:
            rb = rb_even
            steps = _cdiv(rows, rb)

    spec = pl.BlockSpec((rb, hw), lambda i: (i, 0))
    cost = pl.CostEstimate(
        flops=10 * rows * hw,
        transcendentals=2 * rows,
        bytes_accessed=3 * rows * hw * itemsize,
    )
    return pl.pallas_call(
        _make_rows_kernel(hw),
        out_shape=jax.ShapeDtypeStruct((rows, hw), f2.dtype),
        grid=(steps,),
        in_specs=[spec, spec],
        out_specs=spec,
        compiler_params=pltpu.CompilerParams(
            dimension_semantics=("parallel",),
            vmem_limit_bytes=vmem_limit,
        ),
        cost_estimate=cost,
    )(f2, fs2)


# --------------------------------------------------------------------------- #
# hw-split path: stats pass (accumulate sum / sum-of-squares over hw chunks)
# followed by an apply pass.  Needed when hw is too large for a single-row-
# block tile to fit the VMEM budget (e.g. 512x512 feature maps on v7x).
# --------------------------------------------------------------------------- #
def _make_stats_kernel(hw, chw):
    inv_hw = 1.0 / hw
    inv_hw_m1 = 1.0 / (hw - 1) if hw > 1 else float("nan")

    def kernel(f_ref, fs_ref, scale_ref, shift_ref, s_f, q_f, s_fs, q_fs):
        j = pl.program_id(1)

        @pl.when(j == 0)
        def _():
            s_f[...] = jnp.zeros_like(s_f)
            q_f[...] = jnp.zeros_like(q_f)
            s_fs[...] = jnp.zeros_like(s_fs)
            q_fs[...] = jnp.zeros_like(q_fs)

        f = f_ref[...].astype(jnp.float32)
        fs = fs_ref[...].astype(jnp.float32)

        # The last hw chunk may be partial; its out-of-bounds lanes hold
        # unspecified VMEM data, so mask them out of the reductions exactly.
        col = jax.lax.broadcasted_iota(jnp.int32, f.shape, 1) + j * chw
        valid = col < hw
        f = jnp.where(valid, f, 0.0)
        fs = jnp.where(valid, fs, 0.0)

        s_f[...] += jnp.sum(f, axis=1, keepdims=True)
        q_f[...] += jnp.sum(f * f, axis=1, keepdims=True)
        s_fs[...] += jnp.sum(fs, axis=1, keepdims=True)
        q_fs[...] += jnp.sum(fs * fs, axis=1, keepdims=True)

        @pl.when(j == pl.num_programs(1) - 1)
        def _():
            mean_f = s_f[...] * inv_hw
            mean_fs = s_fs[...] * inv_hw
            ss_f = jnp.maximum(q_f[...] - hw * mean_f * mean_f, 0.0)
            ss_fs = jnp.maximum(q_fs[...] - hw * mean_fs * mean_fs, 0.0)
            std_f = jnp.sqrt(ss_f * inv_hw_m1)
            std_fs = jnp.sqrt(ss_fs * inv_hw_m1)
            scale = std_fs / (std_f + 1e-07)
            scale_ref[...] = scale
            shift_ref[...] = mean_fs - mean_f * scale

    return kernel


def _apply_kernel(f_ref, scale_ref, shift_ref, o_ref):
    f = f_ref[...].astype(jnp.float32)
    o_ref[...] = (f * scale_ref[...] + shift_ref[...]).astype(o_ref.dtype)


def _adain_split_hw(f2, fs2, rows, hw, itemsize, align, tile_cap, vmem_limit,
                    small_chunks):
    max_chunk = 256 if small_chunks else 4096  # multiple of 128
    chw = hw if hw <= max_chunk else max_chunk
    rb = max(align, (tile_cap // max(1, chw * itemsize)) // align * align)
    rb = min(rb, _round_up(rows, align))
    row_steps = _cdiv(rows, rb)
    hw_steps = _cdiv(hw, chw)

    tile_spec = pl.BlockSpec((rb, chw), lambda i, j: (i, j))
    stat_spec = pl.BlockSpec((rb, 1), lambda i, j: (i, 0))

    scale, shift = pl.pallas_call(
        _make_stats_kernel(hw, chw),
        out_shape=(
            jax.ShapeDtypeStruct((rows, 1), jnp.float32),
            jax.ShapeDtypeStruct((rows, 1), jnp.float32),
        ),
        grid=(row_steps, hw_steps),
        in_specs=[tile_spec, tile_spec],
        out_specs=(stat_spec, stat_spec),
        scratch_shapes=[pltpu.VMEM((rb, 1), jnp.float32)] * 4,
        compiler_params=pltpu.CompilerParams(
            dimension_semantics=("parallel", "arbitrary"),
            vmem_limit_bytes=vmem_limit,
        ),
        cost_estimate=pl.CostEstimate(
            flops=6 * rows * hw,
            transcendentals=2 * rows,
            bytes_accessed=2 * rows * hw * itemsize,
        ),
    )(f2, fs2)

    out2 = pl.pallas_call(
        _apply_kernel,
        out_shape=jax.ShapeDtypeStruct((rows, hw), f2.dtype),
        grid=(row_steps, hw_steps),
        in_specs=[tile_spec, stat_spec, stat_spec],
        out_specs=tile_spec,
        compiler_params=pltpu.CompilerParams(
            dimension_semantics=("parallel", "arbitrary"),
            vmem_limit_bytes=vmem_limit,
        ),
        cost_estimate=pl.CostEstimate(
            flops=2 * rows * hw,
            transcendentals=0,
            bytes_accessed=2 * rows * hw * itemsize,
        ),
    )(f2, scale, shift)
    return out2


# --------------------------------------------------------------------------- #
# Public wrapper.
# --------------------------------------------------------------------------- #
@functools.partial(jax.jit, static_argnames=("force_split",))
def adain(f, f_style, *, force_split=False):
    """AdaIN forward. f, f_style: (N, C, H, W) arrays of identical shape."""
    assert f.shape == f_style.shape, "f and f_style must have the same shape"
    N, C, H, W = f.shape
    rows = N * C
    hw = H * W
    itemsize = jnp.dtype(f.dtype).itemsize
    # Sublane alignment: 8 rows for 32-bit, 16 for 16-bit dtypes.
    align = 16 if itemsize == 2 else 8

    try:
        vmem_cap = int(pltpu.get_tpu_info().vmem_capacity_bytes)
    except Exception:
        vmem_cap = 64 << 20  # conservative: v7x per-TensorCore VMEM
    vmem_limit = int(max(32 << 20, min(vmem_cap - (8 << 20), 48 << 20)))

    f2 = f.reshape(rows, hw)
    fs2 = f_style.reshape(rows, hw)

    tile_cap = 2 << 20  # ~2 MiB per tile: HBM roofline saturates well below this
    # Minimum single-pass footprint: 3 arrays x 2 pipeline buffers at the
    # smallest row block, plus f32 working copies of f / fs.
    min_single_bytes = align * hw * (6 * itemsize + 2 * 4)
    use_split = force_split or min_single_bytes > (vmem_limit // 2)

    if use_split:
        out2 = _adain_split_hw(f2, fs2, rows, hw, itemsize, align, tile_cap,
                               vmem_limit, small_chunks=force_split)
    else:
        out2 = _adain_single_pass(f2, fs2, rows, hw, itemsize, align, tile_cap,
                                  vmem_limit)

    return out2.reshape(N, C, H, W)


def _adain_ref(f, f_style):
    """Pure-JAX reference matching the PyTorch module."""
    mean_f = f.mean(axis=(2, 3), keepdims=True)
    std_f = f.std(axis=(2, 3), keepdims=True, ddof=1)
    mean_fs = f_style.mean(axis=(2, 3), keepdims=True)
    std_fs = f_style.std(axis=(2, 3), keepdims=True, ddof=1)
    return std_fs * ((f - mean_f) / (std_f + 1e-07)) + mean_fs


if __name__ == "__main__":
    key = jax.random.PRNGKey(0)
    k1, k2 = jax.random.split(key)

    # Small NCHW case (hw = 256, lane-aligned).
    N, C, H, W = 2, 4, 16, 16
    f = jax.random.normal(k1, (N, C, H, W), dtype=jnp.float32)
    f_style = 2.0 * jax.random.normal(k2, (N, C, H, W), dtype=jnp.float32) + 1.0
    out = jax.block_until_ready(adain(f, f_style))
    ref = _adain_ref(f, f_style)
    assert out.shape == (N, C, H, W)
    assert jnp.allclose(out, ref, atol=1e-5, rtol=1e-5)

    # Non-lane-dense spatial size (hw = 196): exercises the masked partial
    # stores without any HBM-side padding.
    f_b = jax.random.normal(k1, (2, 6, 14, 14), dtype=jnp.float32)
    fs_b = 0.5 * jax.random.normal(k2, (2, 6, 14, 14), dtype=jnp.float32) - 1.0
    out_b = jax.block_until_ready(adain(f_b, fs_b))
    assert jnp.allclose(out_b, _adain_ref(f_b, fs_b), atol=1e-5, rtol=1e-5)

    # Force the hw-split (stats + apply) path, including a partial hw chunk.
    f_c = 1.5 * jax.random.normal(k1, (2, 4, 18, 18), dtype=jnp.float32) + 0.5
    fs_c = 0.7 * jax.random.normal(k2, (2, 4, 18, 18), dtype=jnp.float32) - 0.3
    out_c = jax.block_until_ready(adain(f_c, fs_c, force_split=True))
    assert jnp.allclose(out_c, _adain_ref(f_c, fs_c), atol=1e-5, rtol=1e-5)

    print("KERNEL_OK")
</pallas_src>

<mosaic_0001>
module attributes {stable_mosaic.version = 11 : i64} {
  func.func @kernel(%arg0: i32, %arg1: memref<8x256xf32, #tpu.memory_space<vmem>>, %arg2: memref<8x256xf32, #tpu.memory_space<vmem>>, %arg3: memref<8x256xf32, #tpu.memory_space<vmem>>) attributes {dimension_semantics = [#tpu.dimension_semantics<parallel>], iteration_bounds = array<i64: 1>, scalar_prefetch = 0 : i64, scratch_operands = 0 : i64, tpu.core_type = #tpu.core_type<tc>, window_params = [{transform_indices = @transform_0, window_bounds = array<i64: 8, 256>}, {transform_indices = @transform_1, window_bounds = array<i64: 8, 256>}, {transform_indices = @transform_2, window_bounds = array<i64: 8, 256>}]} {
    %c0 = arith.constant 0 : index
    %c0_0 = arith.constant 0 : index
    %0 = vector.load %arg1[%c0, %c0_0] : memref<8x256xf32, #tpu.memory_space<vmem>>, vector<8x256xf32>
    %c0_1 = arith.constant 0 : index
    %c0_2 = arith.constant 0 : index
    %1 = vector.load %arg2[%c0_1, %c0_2] : memref<8x256xf32, #tpu.memory_space<vmem>>, vector<8x256xf32>
    %cst = arith.constant dense<0.000000e+00> : vector<8xf32>
    %2 = vector.multi_reduction <add>, %0, %cst [1] : vector<8x256xf32> to vector<8xf32>
    %3 = vector.shape_cast %2 : vector<8xf32> to vector<8x1xf32>
    %cst_3 = arith.constant 3.906250e-03 : f32
    %4 = vector.broadcast %cst_3 : f32 to vector<8x1xf32>
    %5 = arith.mulf %3, %4 : vector<8x1xf32>
    %cst_4 = arith.constant dense<0.000000e+00> : vector<8xf32>
    %6 = vector.multi_reduction <add>, %1, %cst_4 [1] : vector<8x256xf32> to vector<8xf32>
    %7 = vector.shape_cast %6 : vector<8xf32> to vector<8x1xf32>
    %cst_5 = arith.constant 3.906250e-03 : f32
    %8 = vector.broadcast %cst_5 : f32 to vector<8x1xf32>
    %9 = arith.mulf %7, %8 : vector<8x1xf32>
    %10 = vector.broadcast %5 : vector<8x1xf32> to vector<8x256xf32>
    %11 = arith.subf %0, %10 : vector<8x256xf32>
    %12 = arith.mulf %11, %11 : vector<8x256xf32>
    %cst_6 = arith.constant dense<0.000000e+00> : vector<8xf32>
    %13 = vector.multi_reduction <add>, %12, %cst_6 [1] : vector<8x256xf32> to vector<8xf32>
    %14 = vector.shape_cast %13 : vector<8xf32> to vector<8x1xf32>
    %15 = arith.mulf %1, %1 : vector<8x256xf32>
    %cst_7 = arith.constant dense<0.000000e+00> : vector<8xf32>
    %16 = vector.multi_reduction <add>, %15, %cst_7 [1] : vector<8x256xf32> to vector<8xf32>
    %17 = vector.shape_cast %16 : vector<8xf32> to vector<8x1xf32>
    %cst_8 = arith.constant 2.560000e+02 : f32
    %18 = vector.broadcast %cst_8 : f32 to vector<8x1xf32>
    %19 = arith.mulf %18, %9 : vector<8x1xf32>
    %20 = arith.mulf %19, %9 : vector<8x1xf32>
    %21 = arith.subf %17, %20 : vector<8x1xf32>
    %cst_9 = arith.constant 0.000000e+00 : f32
    %22 = vector.broadcast %cst_9 : f32 to vector<8x1xf32>
    %23 = arith.maximumf %21, %22 : vector<8x1xf32>
    %cst_10 = arith.constant 0.00392156886 : f32
    %24 = vector.broadcast %cst_10 : f32 to vector<8x1xf32>
    %25 = arith.mulf %14, %24 : vector<8x1xf32>
    %26 = math.sqrt %25 : vector<8x1xf32>
    %cst_11 = arith.constant 0.00392156886 : f32
    %27 = vector.broadcast %cst_11 : f32 to vector<8x1xf32>
    %28 = arith.mulf %23, %27 : vector<8x1xf32>
    %29 = math.sqrt %28 : vector<8x1xf32>
    %cst_12 = arith.constant 1.000000e-07 : f32
    %30 = vector.broadcast %cst_12 : f32 to vector<8x1xf32>
    %31 = arith.addf %26, %30 : vector<8x1xf32>
    %32 = arith.divf %29, %31 : vector<8x1xf32>
    %33 = arith.mulf %5, %32 : vector<8x1xf32>
    %34 = arith.subf %9, %33 : vector<8x1xf32>
    %35 = vector.broadcast %32 : vector<8x1xf32> to vector<8x256xf32>
    %36 = arith.mulf %0, %35 : vector<8x256xf32>
    %37 = vector.broadcast %34 : vector<8x1xf32> to vector<8x256xf32>
    %38 = arith.addf %36, %37 : vector<8x256xf32>
    %c0_13 = arith.constant 0 : index
    %c0_14 = arith.constant 0 : index
    %39 = vector.load %arg3[%c0_13, %c0_14] : memref<8x256xf32, #tpu.memory_space<vmem>>, vector<8x256xf32>
    tpu.vector_store %arg3[%c0_13, %c0_14], %38 {strides = array<i32>} : memref<8x256xf32, #tpu.memory_space<vmem>>, vector<8x256xf32>,
    return
  }
  func.func @transform_0(%arg0: i32) -> (i32, i32) {
    %c0_i32 = arith.constant 0 : i32
    %c0_i32_0 = arith.constant 0 : i32
    return %arg0, %c0_i32 : i32, i32
  }
  func.func @transform_1(%arg0: i32) -> (i32, i32) {
    %c0_i32 = arith.constant 0 : i32
    %c0_i32_0 = arith.constant 0 : i32
    return %arg0, %c0_i32 : i32, i32
  }
  func.func @transform_2(%arg0: i32) -> (i32, i32) {
    %c0_i32 = arith.constant 0 : i32
    %c0_i32_0 = arith.constant 0 : i32
    return %arg0, %c0_i32 : i32, i32
  }
}

</mosaic_0001>

<llo_original>
// kernel: adain.1
$region0: #{adain.1}
  #allocation0 [shape = 'u32[]', space=smem, size = 0x4, offset = 0x4, fixed_abs, tag = 'smem constant byte address 0x4 - core index']
  #allocation1 [shape = 'u32[72,128]{1,0:T(1,128)}', space=vmem, size = 0x9000, scoped, tag = 'internal scratch']
  %s0 = inlined_call_operand.vmem [shape: f32[8,256], index: 0, kind: input, shape index: {}]
  %s1 = inlined_call_operand.vmem [shape: f32[8,256], index: 1, kind: input, shape index: {}]
  %s2 = inlined_call_operand.vmem [shape: f32[8,256], index: 2, kind: output, shape index: {}]
  %s3 = sld [smem:[#allocation0]]
  $region18: #{adain.1} parent=0
    _
  %s5 = ssub.s32 1, %s3
  %s6 = scalar_select 0, %s5, %s3
  // Predicated region
  $region2: #{adain.1} parent=0 // pred_check
    _
  $region3: #{adain.1} parent=0 // pred_check_branch
    %8 = sbr.rel (0) target = $region5
  $region4: #{adain.1} parent=0 // pred_region
    _
  $region5: #{adain.1} parent=0 // pred_fallthru
    _
  // Predicated region
  $region6: #{adain.1} parent=0 // pred_check
    _
  $region7: #{adain.1} parent=0 // pred_check_branch
    %10 = sbr.rel (0) target = $region9
  $region8: #{adain.1} parent=0 // pred_region
    _
  $region9: #{adain.1} parent=0 // pred_fallthru
    _
  %v11 = vld [vmem:[%s0] sm:$0xff]
  %v12 = vld [vmem:[%s0 + $0x8] sm:$0xff]
  %v13 = vld [vmem:[%s1] sm:$0xff]
  %v14 = vld [vmem:[%s1 + $0x8] sm:$0xff]
  %v15 = vadd.f32 %v11, %v12
  %16 = vadd.xlane.f32.xlu0 %v15
  %v17 = vpop.xlane.xlu0 %16
  %v18 = vmul.f32 %v17, 0.00390625
  %v19 = vadd.f32 %v13, %v14
  %20 = vadd.xlane.f32.xlu0 %v19
  %v21 = vpop.xlane.xlu0 %20
  %v22 = vmul.f32 %v21, 0.00390625
  %v23 = vsub.f32 %v11, %v18
  %v24 = vsub.f32 %v12, %v18
  %v25 = vmul.f32 %v23, %v23
  %v26 = vmul.f32 %v24, %v24
  %v27 = vadd.f32 %v25, %v26
  %28 = vadd.xlane.f32.xlu0 %v27
  %v29 = vpop.xlane.xlu0 %28
  %v30 = vmul.f32 %v13, %v13
  %v31 = vmul.f32 %v14, %v14
  %v32 = vadd.f32 %v30, %v31
  %33 = vadd.xlane.f32.xlu0 %v32
  %v34 = vpop.xlane.xlu0 %33
  %v35 = vmul.f32 %v22, 256.0
  %v36 = vmul.f32 %v35, %v22
  %v37 = vsub.f32 %v34, %v36
  %v38 = vmax.f32 %v37, 0.0
  %v39 = vmul.f32 %v29, 0.003921569
  %v40 = vrsqrt.pop %v39
  %v41 = vmul.f32 %v40, %v39
  %v42 = vmul.f32 %v41, %v40
  %v43 = vmul.f32 0.5, %v42
  %v44 = vsub.f32 1.5, %v43
  %v45 = vmul.f32 %v40, %v44
  %v46 = vmul.f32 %v39, %v45
  %vm47 = vcmp.eq.f32.partialorder %v39, inf
  %v48 = vsel %vm47, %v39, %v46
  %vm49 = vcmp.eq.f32.partialorder %v39, 0.0
  %v50 = vand.u32 %v39, 2147483648
  %v51 = vsel %vm49, %v50, %v48
  %v52 = vmul.f32 %v38, 0.003921569
  %v53 = vrsqrt.pop %v52
  %v54 = vmul.f32 %v53, %v52
  %v55 = vmul.f32 %v54, %v53
  %v56 = vmul.f32 0.5, %v55
  %v57 = vsub.f32 1.5, %v56
  %v58 = vmul.f32 %v53, %v57
  %v59 = vmul.f32 %v52, %v58
  %vm60 = vcmp.eq.f32.partialorder %v52, inf
  %v61 = vsel %vm60, %v52, %v59
  %vm62 = vcmp.eq.f32.partialorder %v52, 0.0
  %v63 = vand.u32 %v52, 2147483648
  %v64 = vsel %vm62, %v63, %v61
  %v65 = vadd.f32 %v51, 1e-07
  %v66 = vrcp.pop %v65
  %v67 = vmul.f32 %v65, %v66
  %v68 = vsub.f32 1.0, %v67
  %v69 = vmul.f32 %v66, %v68
  %v70 = vadd.f32 %v66, %v69
  %vm71 = vweird.f32 %v65
  %vm72 = vweird.f32 %v66
  %vm73 = vmor %vm71, %vm72
  %v74 = vsel %vm73, %v66, %v70
  %v75 = vand.u32 2147483647, %v65
  %vm76 = vcmp.eq.f32.partialorder %v75, 8.507059e+37
  %v77 = vand.u32 %v65, 2147483648
  %v78 = vor.u32 1.1754944e-38, %v77
  %v79 = vsel %vm76, %v78, %v74
  %v80 = vmul.f32 %v64, %v79
  %v81 = vmul.f32 %v18, %v80
  %v82 = vsub.f32 %v22, %v81
  %v83 = vmul.f32 %v11, %v80
  %v84 = vmul.f32 %v12, %v80
  %v85 = vadd.f32 %v83, %v82
  %v86 = vadd.f32 %v84, %v82
  %87 = vst [vmem:[%s2] sm:$0xff] %v85
  %88 = vst [vmem:[%s2 + $0x8] sm:$0xff] %v86
  // Predicated region
  $region10: #{adain.1} parent=0 // pred_check
    _
  $region11: #{adain.1} parent=0 // pred_check_branch
    %90 = sbr.rel (0) target = $region13
  $region12: #{adain.1} parent=0 // pred_region
    _
  $region13: #{adain.1} parent=0 // pred_fallthru
    _
  // Predicated region
  $region14: #{adain.1} parent=0 // pred_check
    _
  $region15: #{adain.1} parent=0 // pred_check_branch
    %92 = sbr.rel (0) target = $region17
  $region16: #{adain.1} parent=0 // pred_region
    _
  $region17: #{adain.1} parent=0 // pred_fallthru
    _

</llo_original>
